<compile_context>
chip_gen: v6e
topology: v6e:2x2x1
jax: 0.10.0
libtpu: 0.0.40
codegen_flags: <defaults>
</compile_context>

<pallas_src>
import functools

import jax
import jax.numpy as jnp
from jax.experimental import pallas as pl
from jax.experimental.pallas import tpu as pltpu


def _round_up(x: int, m: int) -> int:
    return (x + m - 1) // m * m


def _logreg_kernel(x_ref, w_ref, b_ref, o_ref):
    # MXU matmul with f32 accumulation, bias add + sigmoid on VPU/EUP (f32),
    # all resident in VMEM.  Sigmoid's exp lands in the EUP slot, which has
    # plenty of slack in this mem-bound regime (effectively free).
    acc = jnp.dot(x_ref[...], w_ref[...], preferred_element_type=jnp.float32)
    acc = acc + b_ref[...].astype(jnp.float32)          # (tm, Np) + (1, Np)
    o_ref[...] = jax.nn.sigmoid(acc).astype(o_ref.dtype)


def _pick_tm(B, in_dim, n_pad, x_bytes, w_bytes, out_bytes,
             vmem_budget=40 << 20, tm_cap=1024):
    """Largest batch tile (multiple of 8) whose double-buffered X/out tiles plus
    the resident W/bias fit the VMEM budget (budget chosen to fit v7x 64 MiB)."""
    resident = in_dim * n_pad * w_bytes + n_pad * 4            # W + bias
    per_row = 2 * in_dim * x_bytes + 2 * n_pad * out_bytes     # dbl-buffered X + out
    avail = max(vmem_budget - resident, 8 * per_row)
    tm = max(8, (avail // per_row) // 8 * 8)
    tm = min(tm_cap, tm, _round_up(B, 8))
    resident_bytes = resident + tm * per_row
    return int(tm), int(resident_bytes)


def logistic_regression(x, w, b, *, compute_dtype=None, tm_cap=1024):
    """y = sigmoid(x @ w + b) via a single Pallas TPU kernel.

    x: (B, in_dim);  w: (in_dim, out_dim);  b: (out_dim,) or (1, out_dim).
    compute_dtype: optionally cast x/w (e.g. jnp.bfloat16) for the matmul;
                   accumulation is always f32, output keeps x.dtype.
    """
    B, in_dim = x.shape
    in_dim_w, out_dim = w.shape
    assert in_dim_w == in_dim, "weight shape must be (in_dim, out_dim)"
    b = jnp.reshape(b, (1, out_dim))
    out_dtype = x.dtype

    # Optional low-precision streaming of X / W (f32 accumulate in the kernel).
    if compute_dtype is not None:
        x = x.astype(compute_dtype)
        w = w.astype(compute_dtype)
    b = b.astype(jnp.float32)

    # Lane-dense output: pad N up to a multiple of 128 (full-width stores).
    n_pad_cols = (-out_dim) % 128
    n_padded = out_dim + n_pad_cols
    if n_pad_cols:
        w = jnp.pad(w, ((0, 0), (0, n_pad_cols)))
        b = jnp.pad(b, ((0, 0), (0, n_pad_cols)))

    # Pick the batch tile and pad B to a multiple of it.
    tm, vmem_bytes = _pick_tm(
        B, in_dim, n_padded,
        x_bytes=x.dtype.itemsize, w_bytes=w.dtype.itemsize,
        out_bytes=jnp.dtype(out_dtype).itemsize, tm_cap=tm_cap)
    b_padded = _round_up(B, tm)
    if b_padded != B:
        x = jnp.pad(x, ((0, b_padded - B), (0, 0)))
    grid = (b_padded // tm,)

    vmem_limit = min(56 << 20, max(int(vmem_bytes * 1.5), 32 << 20))

    cost = pl.CostEstimate(
        flops=2 * B * in_dim * out_dim,
        transcendentals=B * out_dim,                       # exp in sigmoid
        bytes_accessed=(x.size * x.dtype.itemsize
                        + w.size * w.dtype.itemsize
                        + b.size * b.dtype.itemsize
                        + b_padded * n_padded * jnp.dtype(out_dtype).itemsize),
    )

    y = pl.pallas_call(
        _logreg_kernel,
        out_shape=jax.ShapeDtypeStruct((b_padded, n_padded), out_dtype),
        grid_spec=pltpu.PrefetchScalarGridSpec(
            num_scalar_prefetch=0,
            grid=grid,
            in_specs=[
                pl.BlockSpec((tm, in_dim), lambda i: (i, 0)),        # X tile (streamed)
                pl.BlockSpec((in_dim, n_padded), lambda i: (0, 0)),  # W (resident)
                pl.BlockSpec((1, n_padded), lambda i: (0, 0)),       # bias (resident)
            ],
            out_specs=pl.BlockSpec((tm, n_padded), lambda i: (i, 0)),
        ),
        compiler_params=pltpu.CompilerParams(
            dimension_semantics=("parallel",),
            vmem_limit_bytes=vmem_limit,
        ),
        cost_estimate=cost,
    )(x, w, b)

    return y[:B, :out_dim]


if __name__ == "__main__":
    # Small shapes consistent with LogisticRegresssion(in_dim, out_dim).
    B, in_dim, out_dim = 8, 32, 8

    key = jax.random.PRNGKey(0)
    kx, kw, kb = jax.random.split(key, 3)

    # Deterministic init mimicking nn.Linear's U(-1/sqrt(in), 1/sqrt(in)).
    bound = 1.0 / (in_dim ** 0.5)
    x = jax.random.normal(kx, (B, in_dim), dtype=jnp.float32)
    w = jax.random.uniform(kw, (in_dim, out_dim), minval=-bound, maxval=bound,
                           dtype=jnp.float32)
    b = jax.random.uniform(kb, (1, out_dim), minval=-bound, maxval=bound,
                           dtype=jnp.float32)

    # f32 path (strict check against plain-JAX reference).
    y = logistic_regression(x, w, b)
    jax.block_until_ready(y)
    y_ref = jax.nn.sigmoid(x @ w + b)
    assert y.shape == (B, out_dim)
    assert jnp.allclose(y, y_ref, atol=1e-5, rtol=1e-5)

    # bf16 fast path (f32 accumulation) — loose tolerance vs f32 reference.
    y_bf = logistic_regression(x, w, b, compute_dtype=jnp.bfloat16)
    jax.block_until_ready(y_bf)
    assert y_bf.shape == (B, out_dim)
    assert jnp.allclose(y_bf, y_ref, atol=5e-2)

    # Batch not divisible by the tile — exercises the padding path.
    x_odd = jax.random.normal(kx, (13, in_dim), dtype=jnp.float32)
    y_odd = logistic_regression(x_odd, w, b)
    jax.block_until_ready(y_odd)
    assert jnp.allclose(y_odd, jax.nn.sigmoid(x_odd @ w + b), atol=1e-5, rtol=1e-5)

    print("KERNEL_OK")
</pallas_src>

<mosaic_0001>
module attributes {stable_mosaic.version = 11 : i64} {
  func.func @_logreg_kernel(%arg0: i32, %arg1: memref<8x32xf32, #tpu.memory_space<vmem>>, %arg2: memref<32x128xf32, #tpu.memory_space<vmem>>, %arg3: memref<1x128xf32, #tpu.memory_space<vmem>>, %arg4: memref<8x128xf32, #tpu.memory_space<vmem>>) attributes {dimension_semantics = [#tpu.dimension_semantics<parallel>], iteration_bounds = array<i64: 1>, scalar_prefetch = 0 : i64, scratch_operands = 0 : i64, tpu.core_type = #tpu.core_type<tc>, window_params = [{transform_indices = @transform_0, window_bounds = array<i64: 8, 32>}, {pipeline_mode = #tpu.pipeline_mode<synchronous>, transform_indices = @transform_1, window_bounds = array<i64: 32, 128>}, {pipeline_mode = #tpu.pipeline_mode<synchronous>, transform_indices = @transform_2, window_bounds = array<i64: 1, 128>}, {transform_indices = @transform_3, window_bounds = array<i64: 8, 128>}]} {
    %c0 = arith.constant 0 : index
    %c0_0 = arith.constant 0 : index
    %0 = vector.load %arg1[%c0, %c0_0] : memref<8x32xf32, #tpu.memory_space<vmem>>, vector<8x32xf32>
    %c0_1 = arith.constant 0 : index
    %c0_2 = arith.constant 0 : index
    %1 = vector.load %arg2[%c0_1, %c0_2] : memref<32x128xf32, #tpu.memory_space<vmem>>, vector<32x128xf32>
    %cst = arith.constant dense<0.000000e+00> : vector<8x128xf32>
    %2 = tpu.matmul %0, %1, %cst {dimension_numbers = #tpu.dot_dimension_numbers<[1], [0], [0], [1], [0, 0, 1, 1], [], []>} : vector<8x32xf32>, vector<32x128xf32>, vector<8x128xf32> -> vector<8x128xf32>
    %c0_3 = arith.constant 0 : index
    %c0_4 = arith.constant 0 : index
    %3 = vector.load %arg3[%c0_3, %c0_4] : memref<1x128xf32, #tpu.memory_space<vmem>>, vector<1x128xf32>
    %4 = vector.broadcast %3 : vector<1x128xf32> to vector<8x128xf32>
    %5 = arith.addf %2, %4 : vector<8x128xf32>
    %6 = arith.negf %5 : vector<8x128xf32>
    %7 = math.exp %6 : vector<8x128xf32>
    %cst_5 = arith.constant 1.000000e+00 : f32
    %8 = vector.broadcast %cst_5 : f32 to vector<8x128xf32>
    %9 = arith.addf %8, %7 : vector<8x128xf32>
    %10 = arith.divf %8, %9 : vector<8x128xf32>
    %c0_6 = arith.constant 0 : index
    %c0_7 = arith.constant 0 : index
    %11 = vector.load %arg4[%c0_6, %c0_7] : memref<8x128xf32, #tpu.memory_space<vmem>>, vector<8x128xf32>
    tpu.vector_store %arg4[%c0_6, %c0_7], %10 {strides = array<i32>} : memref<8x128xf32, #tpu.memory_space<vmem>>, vector<8x128xf32>,
    return
  }
  func.func @transform_0(%arg0: i32) -> (i32, i32) {
    %c0_i32 = arith.constant 0 : i32
    %c0_i32_0 = arith.constant 0 : i32
    return %arg0, %c0_i32 : i32, i32
  }
  func.func @transform_1(%arg0: i32) -> (i32, i32) {
    %c0_i32 = arith.constant 0 : i32
    %c0_i32_0 = arith.constant 0 : i32
    %c0_i32_1 = arith.constant 0 : i32
    return %c0_i32, %c0_i32_0 : i32, i32
  }
  func.func @transform_2(%arg0: i32) -> (i32, i32) {
    %c0_i32 = arith.constant 0 : i32
    %c0_i32_0 = arith.constant 0 : i32
    %c0_i32_1 = arith.constant 0 : i32
    return %c0_i32, %c0_i32_0 : i32, i32
  }
  func.func @transform_3(%arg0: i32) -> (i32, i32) {
    %c0_i32 = arith.constant 0 : i32
    %c0_i32_0 = arith.constant 0 : i32
    return %arg0, %c0_i32 : i32, i32
  }
}

</mosaic_0001>

<llo_original>
// kernel: tpu_custom_call.1
$region0: #{tpu_custom_call.1}
  #allocation0 [shape = 'u32[]', space=smem, size = 0x4, offset = 0x4, fixed_abs, tag = 'smem constant byte address 0x4 - core index']
  #allocation1 [shape = 'u32[144,128]{1,0:T(1,128)}', space=vmem, size = 0x12000, scoped, tag = 'internal scratch']
  %s0 = inlined_call_operand.hbm [shape: f32[8,32], index: 0, kind: input, shape index: {}]
  %s1 = inlined_call_operand.hbm [shape: f32[32,128], index: 1, kind: input, shape index: {}]
  %s2 = inlined_call_operand.vmem [shape: f32[1,128], index: 2, kind: input, shape index: {}]
  %s3 = inlined_call_operand.hbm [shape: f32[8,128], index: 3, kind: output, shape index: {}]
  %s4 = sld [smem:[#allocation0]]
  $region30: #{tpu_custom_call.1} parent=0
    _
  %s6 = ssub.s32 1, %s4
  %s7 = scalar_select 0, %s6, %s4
  $region1: #{tpu_custom_call.1} parent=0
    #allocation2 [shape = 'u8[4096]{0}', space=vmem, size = 0x1000, scoped, tag = 'input window, operand 0, single buffered']
    #allocation3 [shape = 's32[1]{0}', space=sflag, size = 0x4, scoped, tag = 'scoped memory for tpu_custom_call.1']
    #allocation4 [shape = 's32[1]{0}', space=sflag, size = 0x4, scoped, tag = 'scoped memory for tpu_custom_call.1']
    #allocation5 [shape = 'u8[16384]{0}', space=vmem, size = 0x4000, scoped, tag = 'input window, operand 1, single buffered']
    #allocation6 [shape = 's32[1]{0}', space=sflag, size = 0x4, scoped, tag = 'scoped memory for tpu_custom_call.1']
    #allocation7 [shape = 'u8[4096]{0}', space=vmem, size = 0x1000, scoped, tag = 'output window, operand 0, single buffered']
    %8 = vsyncpa [#allocation3], 0
    %9 = vsyncpa [#allocation6], 0
    %10 = vsyncpa [#allocation4], 0
    // Predicated region
    $region2: #{tpu_custom_call.1} parent=1 // pred_check
      _
    $region3: #{tpu_custom_call.1} parent=1 // pred_check_branch
      %12 = sbr.rel (0) target = $region5
    $region4: #{tpu_custom_call.1} parent=1 // pred_region
      %s14 = ssub.s32 128, 128
      %15 = vsyncadd [#allocation3], %s14
      %s17 = sshll.u32 [#allocation2], 4
      %s18 = int_to_ptr.vmem [resolvable:$true] %s17
      %20 = dma.hbm_to_vmem [thread:$0]  %s0, 128, %s18, [#allocation3]
    $region5: #{tpu_custom_call.1} parent=1 // pred_fallthru
      _
    // Predicated region
    $region6: #{tpu_custom_call.1} parent=1 // pred_check
      _
    $region7: #{tpu_custom_call.1} parent=1 // pred_check_branch
      %22 = sbr.rel (0) target = $region9
    $region8: #{tpu_custom_call.1} parent=1 // pred_region
      %s24 = ssub.s32 512, 512
      %25 = vsyncadd [#allocation6], %s24
      %s26 = sshll.u32 [#allocation5], 4
      %s27 = int_to_ptr.vmem [resolvable:$true] %s26
      %32 = dma.hbm_to_vmem [thread:$0]  %s1, 512, %s27, [#allocation6], 128, 128, 8
    $region9: #{tpu_custom_call.1} parent=1 // pred_fallthru
      _
    // Predicated region
    $region10: #{tpu_custom_call.1} parent=1 // pred_check
      _
    $region11: #{tpu_custom_call.1} parent=1 // pred_check_branch
      %34 = sbr.rel (0) target = $region13
    $region12: #{tpu_custom_call.1} parent=1 // pred_region
      _
    $region13: #{tpu_custom_call.1} parent=1 // pred_fallthru
      _
    // Predicated region
    $region14: #{tpu_custom_call.1} parent=1 // pred_check
      _
    $region15: #{tpu_custom_call.1} parent=1 // pred_check_branch
      %36 = sbr.rel (0) target = $region17
    $region16: #{tpu_custom_call.1} parent=1 // pred_region
      %37 = dma.done [#allocation3], 128
    $region17: #{tpu_custom_call.1} parent=1 // pred_fallthru
      _
    // Predicated region
    $region18: #{tpu_custom_call.1} parent=1 // pred_check
      _
    $region19: #{tpu_custom_call.1} parent=1 // pred_check_branch
      %39 = sbr.rel (0) target = $region21
    $region20: #{tpu_custom_call.1} parent=1 // pred_region
      %40 = dma.done [#allocation6], 512
    $region21: #{tpu_custom_call.1} parent=1 // pred_fallthru
      _
    %v41 = vld [vmem:[#allocation2] sm:$0xff]
    %v42 = vld [vmem:[#allocation5] sm:$0xff]
    %v43 = vld [vmem:[#allocation5 + $0x8] sm:$0xff]
    %v44 = vld [vmem:[#allocation5 + $0x10] sm:$0xff]
    %v45 = vld [vmem:[#allocation5 + $0x18] sm:$0xff]
    %v46 = vld [vmem:[%s2] sm:$0x1]
    %v48 = vlaneseq
    %v49 = vshrl.u32 %v48, 7
    %v50 = vsub.s32 0, %v49
    %v51 = vrot.slane %v46, %v50
    %vm53 = vcmask 261120
    %v55 = vsel %vm53, %v41, 0
    %57 = vmatprep.subr.mxu0 0.0
    %58 = vmatpush1.msra.mxu0 0.0
    %59 = vmatprep.subr.mxu0 0.0
    %60 = vmatpush1.msra.mxu0 0.0
    %61 = vmatprep.subr.mxu0 0.0
    %62 = vmatpush1.msra.mxu0 0.0
    %63 = vmatprep.subr.mxu0 0.0
    %64 = vmatpush1.msra.mxu0 0.0
    %65 = vmatprep.subr.mxu0 0.0
    %66 = vmatpush1.msra.mxu0 0.0
    %67 = vmatprep.subr.mxu0 0.0
    %68 = vmatpush1.msra.mxu0 0.0
    %69 = vmatprep.subr.mxu0 0.0
    %70 = vmatpush1.msra.mxu0 0.0
    %71 = vmatprep.subr.mxu0 0.0
    %72 = vmatpush1.msra.mxu0 0.0
    %73 = vmatprep.subr.mxu0 0.0
    %74 = vmatpush1.msra.mxu0 0.0
    %75 = vmatprep.subr.mxu0 0.0
    %76 = vmatpush1.msra.mxu0 0.0
    %77 = vmatprep.subr.mxu0 0.0
    %78 = vmatpush1.msra.mxu0 0.0
    %79 = vmatprep.subr.mxu0 0.0
    %80 = vmatpush1.msra.mxu0 0.0
    %81 = vmatprep.subr.mxu0 0.0
    %82 = vmatpush1.msra.mxu0 %v45
    %83 = vmatprep.subr.mxu0 0.0
    %84 = vmatpush1.msra.mxu0 %v44
    %85 = vmatprep.subr.mxu0 0.0
    %86 = vmatpush1.msra.mxu0 %v43
    %87 = vmatprep.subr.mxu0 0.0
    %88 = vmatpush1.msra.mxu0 %v42
    %89 = vmatprep.subr.mxu0 0.0
    %90 = vmatpush2.msra.mxu0 0.0
    %91 = vmatprep.subr.mxu0 0.0
    %92 = vmatpush2.msra.mxu0 0.0
    %93 = vmatprep.subr.mxu0 0.0
    %94 = vmatpush2.msra.mxu0 0.0
    %95 = vmatprep.subr.mxu0 0.0
    %96 = vmatpush2.msra.mxu0 0.0
    %97 = vmatprep.subr.mxu0 0.0
    %98 = vmatpush2.msra.mxu0 0.0
    %99 = vmatprep.subr.mxu0 0.0
    %100 = vmatpush2.msra.mxu0 0.0
    %101 = vmatprep.subr.mxu0 0.0
    %102 = vmatpush2.msra.mxu0 0.0
    %103 = vmatprep.subr.mxu0 0.0
    %104 = vmatpush2.msra.mxu0 0.0
    %105 = vmatprep.subr.mxu0 0.0
    %106 = vmatpush2.msra.mxu0 0.0
    %107 = vmatprep.subr.mxu0 0.0
    %108 = vmatpush2.msra.mxu0 0.0
    %109 = vmatprep.subr.mxu0 0.0
    %110 = vmatpush2.msra.mxu0 0.0
    %111 = vmatprep.subr.mxu0 0.0
    %112 = vmatpush2.msra.mxu0 0.0
    %113 = vmatprep.subr.mxu0 0.0
    %114 = vmatpush2.msra.mxu0 0.0
    %115 = vmatprep.subr.mxu0 0.0
    %116 = vmatpush2.msra.mxu0 0.0
    %117 = vmatprep.subr.mxu0 0.0
    %118 = vmatpush2.msra.mxu0 0.0
    %119 = vmatprep.subr.mxu0 0.0
    %120 = vmatpush2.msra.mxu0 0.0
    %121 = vmatprep.mubr.f32.mxu0 0.0
    %122 = vmatmul.mubr.f32.gmra.mxu0 %v55
    %v123 = vpop.f32.mrf.mxu0
    %v124 = vadd.f32 %v51, %v123
    %v125 = vpop.f32.mrf.mxu0
    %126 = vdwg.mxu0
    %v127 = vxor.u32 %v124, 2147483648
    %v128 = vmul.f32 %v127, 1.442695
    %v129 = vpow.pop %v128
    %v130 = vadd.f32 %v129, 1.0
    %v131 = vrcp.pop %v130
    %v132 = vmul.f32 1.0, %v131
    %133 = vst [vmem:[#allocation7] sm:$0xff] %v132
    // Predicated region
    $region22: #{tpu_custom_call.1} parent=1 // pred_check
      _
    $region23: #{tpu_custom_call.1} parent=1 // pred_check_branch
      %135 = sbr.rel (0) target = $region25
    $region24: #{tpu_custom_call.1} parent=1 // pred_region
      %s137 = ssub.s32 128, 128
      %138 = vsyncadd [#allocation4], %s137
      %s140 = sshll.u32 [#allocation7], 4
      %s141 = int_to_ptr.vmem [resolvable:$true] %s140
      %143 = dma.vmem_to_hbm [thread:$0]  %s141, 128, %s3, [#allocation4]
    $region25: #{tpu_custom_call.1} parent=1 // pred_fallthru
      _
    // Predicated region
    $region26: #{tpu_custom_call.1} parent=1 // pred_check
      _
    $region27: #{tpu_custom_call.1} parent=1 // pred_check_branch
      %145 = sbr.rel (0) target = $region29
    $region28: #{tpu_custom_call.1} parent=1 // pred_region
      %146 = dma.done [#allocation4], 128
    $region29: #{tpu_custom_call.1} parent=1 // pred_fallthru
      _
    %147 = vsyncpa [#allocation3], 1
    %148 = vsyncpa [#allocation6], 1
    %149 = vsyncpa [#allocation4], 1

</llo_original>
